<compile_context>
chip_gen: v7x
topology: tpu7x:2x2x1
jax: 0.10.0
libtpu: 0.0.40
codegen_flags: <defaults>
</compile_context>

<pallas_src>
import jax
import jax.numpy as jnp
from jax.experimental import pallas as pl
from jax.experimental.pallas import tpu as pltpu

BN_EPS = 1e-5
LANE = 128
SUBLANE = 8


def _round_up(n, m):
    return (n + m - 1) // m * m


def _pad_to(a, shape):
    pads = [(0, t - s) for s, t in zip(a.shape, shape)]
    return jnp.pad(a, pads)


# ----------------------------------------------------------------------------
# Kernel: fused MLP forward on one batch tile.
#   refs = (x_ref, bias_pack_ref, w1_ref, ..., wL_ref, o_ref)
# BN already folded into weights/biases on the host; dropout is identity in
# eval mode.  Hidden widths are 128-padded (lane-dense MXU passes); the first
# K (= in_size) and final N (= out_size) stay at their true sizes.
# ----------------------------------------------------------------------------
def _mlp_kernel(x_ref, bias_ref, *rest):
    w_refs, o_ref = rest[:-1], rest[-1]
    n_layers = len(w_refs)
    bias = bias_ref[...]                       # (L, max_width) -- tiny
    h = x_ref[...]
    for i, w_ref in enumerate(w_refs):
        w = w_ref[...]
        d_out = w.shape[1]
        h = jnp.dot(h, w, preferred_element_type=jnp.float32)
        h = h + bias[i:i + 1, :d_out]
        if i < n_layers - 1:                   # ReLU on hidden layers only
            h = jnp.maximum(h, 0.0)
    o_ref[...] = h.astype(o_ref.dtype)


# ----------------------------------------------------------------------------
# Host-side algebra: fold eval-mode BatchNorm1d into the next Linear layer.
# Layer order in the module is Linear -> ReLU -> BN -> Dropout, so the BN's
# affine map y = h*s + t (applied AFTER the ReLU) is folded into the
# *following* Linear:  y @ W + b = h @ (diag(s) W) + (t @ W + b).
# ----------------------------------------------------------------------------
def fold_bn(layer_params):
    """layer_params: list of tuples.  Hidden layers: (w, b, gamma, beta, mean,
    var); final layer: (w, b).  w is (in, out); vectors are (1, out).
    Returns a flat tuple (w1, b1, ..., wL, bL) with BN folded away."""
    folded = []
    pend_scale = None
    pend_shift = None
    for lp in layer_params:
        w, b = lp[0], lp[1]
        if pend_scale is not None:
            b = b + pend_shift @ w                     # (1,in) @ (in,out)
            w = pend_scale.reshape(-1, 1) * w          # scale rows of W
            pend_scale = pend_shift = None
        folded.extend([w, b])
        if len(lp) == 6:
            g, be, m, v = lp[2], lp[3], lp[4], lp[5]
            s = g * jax.lax.rsqrt(v + BN_EPS)
            pend_scale = s
            pend_shift = be - m * s
    assert pend_scale is None, "BN after the final Linear is not expected"
    return tuple(folded)


def _prepare_params(layer_params):
    """One-time prep: fold BN, 128-pad hidden widths (exact for linear+ReLU),
    keep the input/output widths true, pack all biases into (L, max_width)."""
    flat = fold_bn(layer_params)
    n_layers = len(flat) // 2
    in_size = flat[0].shape[0]
    out_size = flat[-1].shape[-1]

    weights, bias_rows, widths = [], [], []
    d_in = in_size                              # input features stay unpadded
    for i in range(n_layers):
        w, b = flat[2 * i], flat[2 * i + 1]
        if i < n_layers - 1:
            d_out = _round_up(w.shape[1], LANE)  # lane-dense hidden width
        else:
            d_out = w.shape[1]                   # true output width
        weights.append(_pad_to(w, (d_in, d_out)))
        bias_rows.append(_pad_to(b.reshape(-1), (d_out,)))
        widths.append(d_out)
        d_in = d_out

    max_w = max(widths)
    bias_pack = jnp.stack([_pad_to(r, (max_w,)) for r in bias_rows])  # (L, max_w)
    return tuple(weights), bias_pack, in_size, out_size


# ----------------------------------------------------------------------------
# Forward builder: prep once, return a jitted forward(x).
# ----------------------------------------------------------------------------
def make_enhanced_dnn_forward(layer_params, *, tile_b=None):
    weights, bias_pack, in_size, out_size = _prepare_params(layer_params)
    n_layers = len(weights)

    def forward_impl(x, bias_pack, *weights):
        batch = x.shape[0]
        assert x.shape[1] == in_size

        # Batch tile: >=2 grid steps when batch allows it (v7x 2-TC sharding
        # via the "parallel" axis), capped at 2048 rows.
        tb = tile_b
        if tb is None:
            tb = min(_round_up(pl.cdiv(batch, 2), SUBLANE), 2048)
        tb = max(SUBLANE, min(tb, _round_up(batch, SUBLANE)))
        grid = (pl.cdiv(batch, tb),)

        in_specs = [pl.BlockSpec((tb, in_size), lambda i: (i, 0)),
                    pl.BlockSpec(bias_pack.shape, lambda i: (0, 0))]
        for w in weights:
            # Constant index_map -> fetched once, VMEM-resident across steps.
            # TODO(synk): pipeline_mode=pl.Buffered(1) to drop the unused 2nd
            # weight buffer once hidden dims grow near v7x's 64 MiB VMEM.
            in_specs.append(pl.BlockSpec(w.shape, lambda i: (0, 0)))
        out_specs = pl.BlockSpec((tb, out_size), lambda i: (i, 0))

        weight_elems = sum(w.shape[0] * w.shape[1] for w in weights)
        flops = 2 * batch * weight_elems
        bytes_accessed = 4 * (batch * in_size + bias_pack.size
                              + weight_elems + batch * out_size)
        cost = pl.CostEstimate(flops=int(flops), transcendentals=0,
                               bytes_accessed=int(bytes_accessed))

        # Explicit scoped-VMEM budget: double-buffered activation tiles,
        # (conservatively) double-buffered resident weights/biases, plus the
        # in-kernel hidden intermediates; clamped to [32 MiB, 128 MiB].
        max_w = max(w.shape[1] for w in weights)
        needed = (2 * tb * in_size * 4 + 2 * tb * out_size * 4
                  + 2 * 4 * weight_elems + 2 * 4 * bias_pack.size
                  + (n_layers + 1) * tb * max_w * 4)
        vmem_limit = int(min(128 * 1024 * 1024,
                             max(32 * 1024 * 1024, 2 * needed)))

        return pl.pallas_call(
            _mlp_kernel,
            out_shape=jax.ShapeDtypeStruct((batch, out_size), jnp.float32),
            grid=grid,
            in_specs=in_specs,
            out_specs=out_specs,
            compiler_params=pltpu.CompilerParams(
                dimension_semantics=("parallel",),   # shards over v7x's 2 TCs
                vmem_limit_bytes=vmem_limit),
            cost_estimate=cost,
        )(x, bias_pack, *weights)

    jitted = jax.jit(forward_impl)

    # TODO(synk): optional bf16-weight / bf16-MXU-operand variant (f32 accum,
    # f32 bias/ReLU) for v6e/v7x once tolerance vs the f32 reference allows.
    def forward(x):
        return jitted(x, bias_pack, *weights)

    return forward


# ----------------------------------------------------------------------------
# Synthetic parameters (PyTorch shapes -> kernel layout) and pure-JAX reference
# ----------------------------------------------------------------------------
def _make_params(key, input_size, hidden_layers, output_size):
    dims = [input_size] + list(hidden_layers) + [output_size]
    layers = []
    for i in range(len(dims) - 1):
        fan_in, fan_out = dims[i], dims[i + 1]
        key, kw, kb, kg, kbe, km, kv = jax.random.split(key, 7)
        # nn.Linear weight is (out, in); transpose to (in, out) for the kernel.
        w = jax.random.uniform(kw, (fan_out, fan_in), jnp.float32,
                               minval=-1.0, maxval=1.0) / jnp.sqrt(fan_in)
        b = jax.random.uniform(kb, (fan_out,), jnp.float32,
                               minval=-1.0, maxval=1.0) / jnp.sqrt(fan_in)
        layer = [w.T, b.reshape(1, fan_out)]
        if i < len(hidden_layers):
            gamma = 1.0 + 0.1 * jax.random.normal(kg, (fan_out,), jnp.float32)
            beta = 0.1 * jax.random.normal(kbe, (fan_out,), jnp.float32)
            rmean = 0.1 * jax.random.normal(km, (fan_out,), jnp.float32)
            rvar = 1.0 + 0.1 * jax.random.uniform(kv, (fan_out,), jnp.float32)
            layer += [gamma.reshape(1, fan_out), beta.reshape(1, fan_out),
                      rmean.reshape(1, fan_out), rvar.reshape(1, fan_out)]
        layers.append(tuple(layer))
    return layers


def _reference_forward(x, layers):
    """Un-folded pure-JAX reference matching PyTorch eval-mode forward."""
    h = x
    for lp in layers:
        w, b = lp[0], lp[1]
        h = h @ w + b
        if len(lp) == 6:                       # hidden layer: ReLU -> BN(eval)
            g, be, m, v = lp[2], lp[3], lp[4], lp[5]
            h = jnp.maximum(h, 0.0)
            h = (h - m) / jnp.sqrt(v + BN_EPS) * g + be
            # Dropout: identity in eval mode.
    return h


if __name__ == "__main__":
    # EnhancedDNN(input_size=32, hidden_layers=[64, 48], output_size=16,
    #             dropout_rate=0.5), eval mode.
    input_size, hidden_layers, output_size = 32, [64, 48], 16
    batch = 8

    key = jax.random.PRNGKey(0)
    kx, kp = jax.random.split(key)
    x = jax.random.normal(kx, (batch, input_size), jnp.float32)
    layers = _make_params(kp, input_size, hidden_layers, output_size)

    forward = make_enhanced_dnn_forward(layers)   # one-time BN fold + padding
    out = jax.block_until_ready(forward(x))

    ref = _reference_forward(x, layers)
    assert out.shape == (batch, output_size)
    assert jnp.allclose(out, ref, atol=1e-4, rtol=1e-4), "mismatch vs reference"

    print("KERNEL_OK")
</pallas_src>

<mosaic_0001>
module attributes {stable_mosaic.version = 11 : i64} {
  func.func @_mlp_kernel(%arg0: i32, %arg1: memref<8x32xf32, #tpu.memory_space<vmem>>, %arg2: memref<3x128xf32, #tpu.memory_space<vmem>>, %arg3: memref<32x128xf32, #tpu.memory_space<vmem>>, %arg4: memref<128x128xf32, #tpu.memory_space<vmem>>, %arg5: memref<128x16xf32, #tpu.memory_space<vmem>>, %arg6: memref<8x16xf32, #tpu.memory_space<vmem>>) attributes {dimension_semantics = [#tpu.dimension_semantics<parallel>], iteration_bounds = array<i64: 1>, scalar_prefetch = 0 : i64, scratch_operands = 0 : i64, tpu.core_type = #tpu.core_type<tc>, window_params = [{transform_indices = @transform_0, window_bounds = array<i64: 8, 32>}, {pipeline_mode = #tpu.pipeline_mode<synchronous>, transform_indices = @transform_1, window_bounds = array<i64: 3, 128>}, {pipeline_mode = #tpu.pipeline_mode<synchronous>, transform_indices = @transform_2, window_bounds = array<i64: 32, 128>}, {pipeline_mode = #tpu.pipeline_mode<synchronous>, transform_indices = @transform_3, window_bounds = array<i64: 128, 128>}, {pipeline_mode = #tpu.pipeline_mode<synchronous>, transform_indices = @transform_4, window_bounds = array<i64: 128, 16>}, {transform_indices = @transform_5, window_bounds = array<i64: 8, 16>}]} {
    %c0 = arith.constant 0 : index
    %c0_0 = arith.constant 0 : index
    %0 = vector.load %arg2[%c0, %c0_0] : memref<3x128xf32, #tpu.memory_space<vmem>>, vector<3x128xf32>
    %c0_1 = arith.constant 0 : index
    %c0_2 = arith.constant 0 : index
    %1 = vector.load %arg1[%c0_1, %c0_2] : memref<8x32xf32, #tpu.memory_space<vmem>>, vector<8x32xf32>
    %c0_3 = arith.constant 0 : index
    %c0_4 = arith.constant 0 : index
    %2 = vector.load %arg3[%c0_3, %c0_4] : memref<32x128xf32, #tpu.memory_space<vmem>>, vector<32x128xf32>
    %cst = arith.constant dense<0.000000e+00> : vector<8x128xf32>
    %3 = tpu.matmul %1, %2, %cst {dimension_numbers = #tpu.dot_dimension_numbers<[1], [0], [0], [1], [0, 0, 1, 1], [], []>} : vector<8x32xf32>, vector<32x128xf32>, vector<8x128xf32> -> vector<8x128xf32>
    %4 = vector.extract_strided_slice %0 {offsets = [0, 0], sizes = [1, 128], strides = [1, 1]} : vector<3x128xf32> to vector<1x128xf32>
    %5 = vector.broadcast %4 : vector<1x128xf32> to vector<8x128xf32>
    %6 = arith.addf %3, %5 : vector<8x128xf32>
    %cst_5 = arith.constant 0.000000e+00 : f32
    %7 = vector.broadcast %cst_5 : f32 to vector<8x128xf32>
    %8 = arith.maximumf %6, %7 : vector<8x128xf32>
    %c0_6 = arith.constant 0 : index
    %c0_7 = arith.constant 0 : index
    %9 = vector.load %arg4[%c0_6, %c0_7] : memref<128x128xf32, #tpu.memory_space<vmem>>, vector<128x128xf32>
    %cst_8 = arith.constant dense<0.000000e+00> : vector<8x128xf32>
    %10 = tpu.matmul %8, %9, %cst_8 {dimension_numbers = #tpu.dot_dimension_numbers<[1], [0], [0], [1], [0, 0, 1, 1], [], []>} : vector<8x128xf32>, vector<128x128xf32>, vector<8x128xf32> -> vector<8x128xf32>
    %11 = vector.extract_strided_slice %0 {offsets = [1, 0], sizes = [1, 128], strides = [1, 1]} : vector<3x128xf32> to vector<1x128xf32>
    %12 = vector.broadcast %11 : vector<1x128xf32> to vector<8x128xf32>
    %13 = arith.addf %10, %12 : vector<8x128xf32>
    %cst_9 = arith.constant 0.000000e+00 : f32
    %14 = vector.broadcast %cst_9 : f32 to vector<8x128xf32>
    %15 = arith.maximumf %13, %14 : vector<8x128xf32>
    %c0_10 = arith.constant 0 : index
    %c0_11 = arith.constant 0 : index
    %16 = vector.load %arg5[%c0_10, %c0_11] : memref<128x16xf32, #tpu.memory_space<vmem>>, vector<128x16xf32>
    %cst_12 = arith.constant dense<0.000000e+00> : vector<8x16xf32>
    %17 = tpu.matmul %15, %16, %cst_12 {dimension_numbers = #tpu.dot_dimension_numbers<[1], [0], [0], [1], [0, 0, 1, 1], [], []>} : vector<8x128xf32>, vector<128x16xf32>, vector<8x16xf32> -> vector<8x16xf32>
    %18 = vector.extract_strided_slice %0 {offsets = [2, 0], sizes = [1, 16], strides = [1, 1]} : vector<3x128xf32> to vector<1x16xf32>
    %19 = vector.broadcast %18 : vector<1x16xf32> to vector<8x16xf32>
    %20 = arith.addf %17, %19 : vector<8x16xf32>
    %c0_13 = arith.constant 0 : index
    %c0_14 = arith.constant 0 : index
    %21 = vector.load %arg6[%c0_13, %c0_14] : memref<8x16xf32, #tpu.memory_space<vmem>>, vector<8x16xf32>
    tpu.vector_store %arg6[%c0_13, %c0_14], %20 {strides = array<i32>} : memref<8x16xf32, #tpu.memory_space<vmem>>, vector<8x16xf32>,
    return
  }
  func.func @transform_0(%arg0: i32) -> (i32, i32) {
    %c0_i32 = arith.constant 0 : i32
    %c0_i32_0 = arith.constant 0 : i32
    return %arg0, %c0_i32 : i32, i32
  }
  func.func @transform_1(%arg0: i32) -> (i32, i32) {
    %c0_i32 = arith.constant 0 : i32
    %c0_i32_0 = arith.constant 0 : i32
    %c0_i32_1 = arith.constant 0 : i32
    return %c0_i32, %c0_i32_0 : i32, i32
  }
  func.func @transform_2(%arg0: i32) -> (i32, i32) {
    %c0_i32 = arith.constant 0 : i32
    %c0_i32_0 = arith.constant 0 : i32
    %c0_i32_1 = arith.constant 0 : i32
    return %c0_i32, %c0_i32_0 : i32, i32
  }
  func.func @transform_3(%arg0: i32) -> (i32, i32) {
    %c0_i32 = arith.constant 0 : i32
    %c0_i32_0 = arith.constant 0 : i32
    %c0_i32_1 = arith.constant 0 : i32
    return %c0_i32, %c0_i32_0 : i32, i32
  }
  func.func @transform_4(%arg0: i32) -> (i32, i32) {
    %c0_i32 = arith.constant 0 : i32
    %c0_i32_0 = arith.constant 0 : i32
    %c0_i32_1 = arith.constant 0 : i32
    return %c0_i32, %c0_i32_0 : i32, i32
  }
  func.func @transform_5(%arg0: i32) -> (i32, i32) {
    %c0_i32 = arith.constant 0 : i32
    %c0_i32_0 = arith.constant 0 : i32
    return %arg0, %c0_i32 : i32, i32
  }
}

</mosaic_0001>

<llo_original>
// kernel: forward_impl.1
$region0: #{forward_impl.1}
  #allocation0 [shape = 'u32[]', space=smem, size = 0x4, offset = 0x4, fixed_abs, tag = 'smem constant byte address 0x4 - core index']
  #allocation1 [shape = 'u32[144,128]{1,0:T(1,128)}', space=vmem, size = 0x12000, scoped, tag = 'internal scratch']
  %s0 = inlined_call_operand.vmem [shape: f32[8,32], index: 0, kind: input, shape index: {}]
  %s1 = inlined_call_operand.vmem [shape: f32[3,128], index: 1, kind: input, shape index: {}]
  %s2 = inlined_call_operand.hbm [shape: f32[32,128], index: 2, kind: input, shape index: {}]
  %s3 = inlined_call_operand.vmem [shape: f32[128,128], index: 3, kind: input, shape index: {}]
  %s4 = inlined_call_operand.vmem [shape: f32[128,16], index: 4, kind: input, shape index: {}]
  %s5 = inlined_call_operand.hbm [shape: f32[8,16], index: 5, kind: output, shape index: {}]
  %s6 = sld [smem:[#allocation0]]
  $region34: #{forward_impl.1} parent=0
    _
  %s8 = ssub.s32 1, %s6
  %s9 = scalar_select 0, %s8, %s6
  $region1: #{forward_impl.1} parent=0
    #allocation2 [shape = 'u8[16384]{0}', space=vmem, size = 0x4000, scoped, tag = 'input window, operand 2, single buffered']
    #allocation3 [shape = 's32[1]{0}', space=sflag, size = 0x4, scoped, tag = 'scoped memory for forward_impl.1']
    #allocation4 [shape = 's32[1]{0}', space=sflag, size = 0x4, scoped, tag = 'scoped memory for forward_impl.1']
    #allocation5 [shape = 'u8[4096]{0}', space=vmem, size = 0x1000, scoped, tag = 'output window, operand 0, single buffered']
    %10 = vsyncpa [#allocation3], 0
    %11 = vsyncpa [#allocation4], 0
    // Predicated region
    $region2: #{forward_impl.1} parent=1 // pred_check
      _
    $region3: #{forward_impl.1} parent=1 // pred_check_branch
      %13 = sbr.rel (0) target = $region5
    $region4: #{forward_impl.1} parent=1 // pred_region
      _
    $region5: #{forward_impl.1} parent=1 // pred_fallthru
      _
    // Predicated region
    $region6: #{forward_impl.1} parent=1 // pred_check
      _
    $region7: #{forward_impl.1} parent=1 // pred_check_branch
      %15 = sbr.rel (0) target = $region9
    $region8: #{forward_impl.1} parent=1 // pred_region
      _
    $region9: #{forward_impl.1} parent=1 // pred_fallthru
      _
    // Predicated region
    $region10: #{forward_impl.1} parent=1 // pred_check
      _
    $region11: #{forward_impl.1} parent=1 // pred_check_branch
      %17 = sbr.rel (0) target = $region13
    $region12: #{forward_impl.1} parent=1 // pred_region
      %s19 = ssub.s32 512, 512
      %20 = vsyncadd [#allocation3], %s19
      %s21 = sshll.u32 [#allocation2], 4
      %s22 = int_to_ptr.vmem [resolvable:$true] %s21
      %27 = dma.hbm_to_vmem [thread:$0]  %s2, 512, %s22, [#allocation3], 128, 128, 8
    $region13: #{forward_impl.1} parent=1 // pred_fallthru
      _
    // Predicated region
    $region14: #{forward_impl.1} parent=1 // pred_check
      _
    $region15: #{forward_impl.1} parent=1 // pred_check_branch
      %29 = sbr.rel (0) target = $region17
    $region16: #{forward_impl.1} parent=1 // pred_region
      _
    $region17: #{forward_impl.1} parent=1 // pred_fallthru
      _
    // Predicated region
    $region18: #{forward_impl.1} parent=1 // pred_check
      _
    $region19: #{forward_impl.1} parent=1 // pred_check_branch
      %31 = sbr.rel (0) target = $region21
    $region20: #{forward_impl.1} parent=1 // pred_region
      _
    $region21: #{forward_impl.1} parent=1 // pred_fallthru
      _
    // Predicated region
    $region22: #{forward_impl.1} parent=1 // pred_check
      _
    $region23: #{forward_impl.1} parent=1 // pred_check_branch
      %33 = sbr.rel (0) target = $region25
    $region24: #{forward_impl.1} parent=1 // pred_region
      %34 = dma.done [#allocation3], 512
    $region25: #{forward_impl.1} parent=1 // pred_fallthru
      _
    %v35 = vld [vmem:[%s1] sm:$0x7]
    %v36 = vld [vmem:[%s0] sm:$0xff]
    %v37 = vld [vmem:[#allocation2] sm:$0xff]
    %v38 = vld [vmem:[#allocation2 + $0x8] sm:$0xff]
    %v39 = vld [vmem:[#allocation2 + $0x10] sm:$0xff]
    %v40 = vld [vmem:[#allocation2 + $0x18] sm:$0xff]
    %v41 = vlaneseq
    %v42 = vshrl.u32 %v41, 7
    %v43 = vsub.s32 0, %v42
    %v44 = vrot.slane %v35, %v43
    %vm45 = vcmask 261120
    %v47 = vsel %vm45, %v36, 0
    %49 = vmatprep.subr.mxu0 0.0
    %50 = vmatpush1.msra.mxu0 %v37
    %51 = vmatprep.subr.mxu0 0.0
    %52 = vmatpush1.msra.mxu0 %v38
    %53 = vmatprep.subr.mxu0 0.0
    %54 = vmatpush1.msra.mxu0 %v39
    %55 = vmatprep.subr.mxu0 0.0
    %56 = vmatpush1.msra.mxu0 %v40
    %57 = vmatprep.subr.mxu0 0.0
    %58 = vmatpush1.msra.mxu0 0.0
    %59 = vmatprep.subr.mxu0 0.0
    %60 = vmatpush1.msra.mxu0 0.0
    %61 = vmatprep.subr.mxu0 0.0
    %62 = vmatpush1.msra.mxu0 0.0
    %63 = vmatprep.subr.mxu0 0.0
    %64 = vmatpush1.msra.mxu0 0.0
    %65 = vmatprep.subr.mxu0 0.0
    %66 = vmatpush1.msra.mxu0 0.0
    %67 = vmatprep.subr.mxu0 0.0
    %68 = vmatpush1.msra.mxu0 0.0
    %69 = vmatprep.subr.mxu0 0.0
    %70 = vmatpush1.msra.mxu0 0.0
    %71 = vmatprep.subr.mxu0 0.0
    %72 = vmatpush1.msra.mxu0 0.0
    %73 = vmatprep.subr.mxu0 0.0
    %74 = vmatpush1.msra.mxu0 0.0
    %75 = vmatprep.subr.mxu0 0.0
    %76 = vmatpush1.msra.mxu0 0.0
    %77 = vmatprep.subr.mxu0 0.0
    %78 = vmatpush1.msra.mxu0 0.0
    %79 = vmatprep.subr.mxu0 0.0
    %80 = vmatpush1.msra.mxu0 0.0
    %81 = vmatprep.subr.mxu0 0.0
    %82 = vmatpush1.msra.mxu0 0.0
    %83 = vmatprep.subr.mxu0 0.0
    %84 = vmatpush1.msra.mxu0 0.0
    %85 = vmatprep.subr.mxu0 0.0
    %86 = vmatpush1.msra.mxu0 0.0
    %87 = vmatprep.subr.mxu0 0.0
    %88 = vmatpush1.msra.mxu0 0.0
    %89 = vmatprep.subr.mxu0 0.0
    %90 = vmatpush1.msra.mxu0 0.0
    %91 = vmatprep.subr.mxu0 0.0
    %92 = vmatpush1.msra.mxu0 0.0
    %93 = vmatprep.subr.mxu0 0.0
    %94 = vmatpush1.msra.mxu0 0.0
    %95 = vmatprep.subr.mxu0 0.0
    %96 = vmatpush1.msra.mxu0 0.0
    %97 = vmatprep.subr.mxu0 0.0
    %98 = vmatpush1.msra.mxu0 0.0
    %99 = vmatprep.subr.mxu0 0.0
    %100 = vmatpush1.msra.mxu0 0.0
    %101 = vmatprep.subr.mxu0 0.0
    %102 = vmatpush1.msra.mxu0 0.0
    %103 = vmatprep.subr.mxu0 0.0
    %104 = vmatpush1.msra.mxu0 0.0
    %105 = vmatprep.subr.mxu0 0.0
    %106 = vmatpush1.msra.mxu0 0.0
    %107 = vmatprep.subr.mxu0 0.0
    %108 = vmatpush1.msra.mxu0 0.0
    %109 = vmatprep.subr.mxu0 0.0
    %110 = vmatpush1.msra.mxu0 0.0
    %111 = vmatprep.subr.mxu0 0.0
    %112 = vmatpush1.msra.mxu0 0.0
    %113 = vmatprep.mubr.f32.mxu0 0.0
    %114 = vmatmul.mubr.f32.gmra.mrb[0].mxu0 %v47
    %v115 = vpop.f32.mrb[0].mxu0
    %v116 = vadd.f32 %v44, %v115
    %v117 = vpop.f32.mrb[0].mxu0
    %118 = vdwg.mxu0
    %v119 = vmax.f32 %v116, 0.0
    %v120 = vld [vmem:[%s3] sm:$0xff]
    %v121 = vld [vmem:[%s3 + $0x8] sm:$0xff]
    %v122 = vld [vmem:[%s3 + $0x10] sm:$0xff]
    %v123 = vld [vmem:[%s3 + $0x18] sm:$0xff]
    %v124 = vld [vmem:[%s3 + $0x20] sm:$0xff]
    %v125 = vld [vmem:[%s3 + $0x28] sm:$0xff]
    %v126 = vld [vmem:[%s3 + $0x30] sm:$0xff]
    %v127 = vld [vmem:[%s3 + $0x38] sm:$0xff]
    %v128 = vld [vmem:[%s3 + $0x40] sm:$0xff]
    %v129 = vld [vmem:[%s3 + $0x48] sm:$0xff]
    %v130 = vld [vmem:[%s3 + $0x50] sm:$0xff]
    %v131 = vld [vmem:[%s3 + $0x58] sm:$0xff]
    %v132 = vld [vmem:[%s3 + $0x60] sm:$0xff]
    %v133 = vld [vmem:[%s3 + $0x68] sm:$0xff]
    %v134 = vld [vmem:[%s3 + $0x70] sm:$0xff]
    %v135 = vld [vmem:[%s3 + $0x78] sm:$0xff]
    %v136 = vlaneseq
    %v137 = vshrl.u32 %v136, 7
    %v138 = vsub.s32 1, %v137
    %v139 = vrot.slane %v35, %v138
    %140 = vmatprep.subr.mxu0 0.0
    %141 = vmatpush1.msra.mxu0 %v120
    %142 = vmatprep.subr.mxu0 0.0
    %143 = vmatpush1.msra.mxu0 %v121
    %144 = vmatprep.subr.mxu0 0.0
    %145 = vmatpush1.msra.mxu0 %v122
    %146 = vmatprep.subr.mxu0 0.0
    %147 = vmatpush1.msra.mxu0 %v123
    %148 = vmatprep.subr.mxu0 0.0
    %149 = vmatpush1.msra.mxu0 %v124
    %150 = vmatprep.subr.mxu0 0.0
    %151 = vmatpush1.msra.mxu0 %v125
    %152 = vmatprep.subr.mxu0 0.0
    %153 = vmatpush1.msra.mxu0 %v126
    %154 = vmatprep.subr.mxu0 0.0
    %155 = vmatpush1.msra.mxu0 %v127
    %156 = vmatprep.subr.mxu0 0.0
    %157 = vmatpush1.msra.mxu0 %v128
    %158 = vmatprep.subr.mxu0 0.0
    %159 = vmatpush1.msra.mxu0 %v129
    %160 = vmatprep.subr.mxu0 0.0
    %161 = vmatpush1.msra.mxu0 %v130
    %162 = vmatprep.subr.mxu0 0.0
    %163 = vmatpush1.msra.mxu0 %v131
    %164 = vmatprep.subr.mxu0 0.0
    %165 = vmatpush1.msra.mxu0 %v132
    %166 = vmatprep.subr.mxu0 0.0
    %167 = vmatpush1.msra.mxu0 %v133
    %168 = vmatprep.subr.mxu0 0.0
    %169 = vmatpush1.msra.mxu0 %v134
    %170 = vmatprep.subr.mxu0 0.0
    %171 = vmatpush1.msra.mxu0 %v135
    %172 = vmatprep.subr.mxu0 0.0
    %173 = vmatpush1.msra.mxu0 0.0
    %174 = vmatprep.subr.mxu0 0.0
    %175 = vmatpush1.msra.mxu0 0.0
    %176 = vmatprep.subr.mxu0 0.0
    %177 = vmatpush1.msra.mxu0 0.0
    %178 = vmatprep.subr.mxu0 0.0
    %179 = vmatpush1.msra.mxu0 0.0
    %180 = vmatprep.subr.mxu0 0.0
    %181 = vmatpush1.msra.mxu0 0.0
    %182 = vmatprep.subr.mxu0 0.0
    %183 = vmatpush1.msra.mxu0 0.0
    %184 = vmatprep.subr.mxu0 0.0
    %185 = vmatpush1.msra.mxu0 0.0
    %186 = vmatprep.subr.mxu0 0.0
    %187 = vmatpush1.msra.mxu0 0.0
    %188 = vmatprep.subr.mxu0 0.0
    %189 = vmatpush1.msra.mxu0 0.0
    %190 = vmatprep.subr.mxu0 0.0
    %191 = vmatpush1.msra.mxu0 0.0
    %192 = vmatprep.subr.mxu0 0.0
    %193 = vmatpush1.msra.mxu0 0.0
    %194 = vmatprep.subr.mxu0 0.0
    %195 = vmatpush1.msra.mxu0 0.0
    %196 = vmatprep.subr.mxu0 0.0
    %197 = vmatpush1.msra.mxu0 0.0
    %198 = vmatprep.subr.mxu0 0.0
    %199 = vmatpush1.msra.mxu0 0.0
    %200 = vmatprep.subr.mxu0 0.0
    %201 = vmatpush1.msra.mxu0 0.0
    %202 = vmatprep.subr.mxu0 0.0
    %203 = vmatpush1.msra.mxu0 0.0
    %204 = vmatprep.mubr.f32.mxu0 0.0
    %205 = vmatmul.mubr.f32.gmra.mrb[0].mxu0 %v119
    %v206 = vpop.f32.mrb[0].mxu0
    %v207 = vadd.f32 %v139, %v206
    %v208 = vpop.f32.mrb[0].mxu0
    %209 = vdwg.mxu0
    %v210 = vmax.f32 %v207, 0.0
    %v211 = vld [vmem:[%s4] sm:$0xff]
    %v212 = vld [vmem:[%s4 + $0x8] sm:$0xff]
    %v213 = vld [vmem:[%s4 + $0x10] sm:$0xff]
    %v214 = vld [vmem:[%s4 + $0x18] sm:$0xff]
    %v215 = vld [vmem:[%s4 + $0x20] sm:$0xff]
    %v216 = vld [vmem:[%s4 + $0x28] sm:$0xff]
    %v217 = vld [vmem:[%s4 + $0x30] sm:$0xff]
    %v218 = vld [vmem:[%s4 + $0x38] sm:$0xff]
    %v219 = vld [vmem:[%s4 + $0x40] sm:$0xff]
    %v220 = vld [vmem:[%s4 + $0x48] sm:$0xff]
    %v221 = vld [vmem:[%s4 + $0x50] sm:$0xff]
    %v222 = vld [vmem:[%s4 + $0x58] sm:$0xff]
    %v223 = vld [vmem:[%s4 + $0x60] sm:$0xff]
    %v224 = vld [vmem:[%s4 + $0x68] sm:$0xff]
    %v225 = vld [vmem:[%s4 + $0x70] sm:$0xff]
    %v226 = vld [vmem:[%s4 + $0x78] sm:$0xff]
    %v227 = vlaneseq
    %v228 = vshrl.u32 %v227, 7
    %v229 = vsub.s32 2, %v228
    %v230 = vrot.slane %v35, %v229
    %231 = vmatprep.subr.mxu0 0.0
    %232 = vmatpush1.msra.mxu0 %v211
    %233 = vmatprep.subr.mxu0 0.0
    %234 = vmatpush1.msra.mxu0 %v212
    %235 = vmatprep.subr.mxu0 0.0
    %236 = vmatpush1.msra.mxu0 %v213
    %237 = vmatprep.subr.mxu0 0.0
    %238 = vmatpush1.msra.mxu0 %v214
    %239 = vmatprep.subr.mxu0 0.0
    %240 = vmatpush1.msra.mxu0 %v215
    %241 = vmatprep.subr.mxu0 0.0
    %242 = vmatpush1.msra.mxu0 %v216
    %243 = vmatprep.subr.mxu0 0.0
    %244 = vmatpush1.msra.mxu0 %v217
    %245 = vmatprep.subr.mxu0 0.0
    %246 = vmatpush1.msra.mxu0 %v218
    %247 = vmatprep.subr.mxu0 0.0
    %248 = vmatpush1.msra.mxu0 %v219
    %249 = vmatprep.subr.mxu0 0.0
    %250 = vmatpush1.msra.mxu0 %v220
    %251 = vmatprep.subr.mxu0 0.0
    %252 = vmatpush1.msra.mxu0 %v221
    %253 = vmatprep.subr.mxu0 0.0
    %254 = vmatpush1.msra.mxu0 %v222
    %255 = vmatprep.subr.mxu0 0.0
    %256 = vmatpush1.msra.mxu0 %v223
    %257 = vmatprep.subr.mxu0 0.0
    %258 = vmatpush1.msra.mxu0 %v224
    %259 = vmatprep.subr.mxu0 0.0
    %260 = vmatpush1.msra.mxu0 %v225
    %261 = vmatprep.subr.mxu0 0.0
    %262 = vmatpush1.msra.mxu0 %v226
    %263 = vmatprep.subr.mxu0 0.0
    %264 = vmatpush1.msra.mxu0 0.0
    %265 = vmatprep.subr.mxu0 0.0
    %266 = vmatpush1.msra.mxu0 0.0
    %267 = vmatprep.subr.mxu0 0.0
    %268 = vmatpush1.msra.mxu0 0.0
    %269 = vmatprep.subr.mxu0 0.0
    %270 = vmatpush1.msra.mxu0 0.0
    %271 = vmatprep.subr.mxu0 0.0
    %272 = vmatpush1.msra.mxu0 0.0
    %273 = vmatprep.subr.mxu0 0.0
    %274 = vmatpush1.msra.mxu0 0.0
    %275 = vmatprep.subr.mxu0 0.0
    %276 = vmatpush1.msra.mxu0 0.0
    %277 = vmatprep.subr.mxu0 0.0
    %278 = vmatpush1.msra.mxu0 0.0
    %279 = vmatprep.subr.mxu0 0.0
    %280 = vmatpush1.msra.mxu0 0.0
    %281 = vmatprep.subr.mxu0 0.0
    %282 = vmatpush1.msra.mxu0 0.0
    %283 = vmatprep.subr.mxu0 0.0
    %284 = vmatpush1.msra.mxu0 0.0
    %285 = vmatprep.subr.mxu0 0.0
    %286 = vmatpush1.msra.mxu0 0.0
    %287 = vmatprep.subr.mxu0 0.0
    %288 = vmatpush1.msra.mxu0 0.0
    %289 = vmatprep.subr.mxu0 0.0
    %290 = vmatpush1.msra.mxu0 0.0
    %291 = vmatprep.subr.mxu0 0.0
    %292 = vmatpush1.msra.mxu0 0.0
    %293 = vmatprep.subr.mxu0 0.0
    %294 = vmatpush1.msra.mxu0 0.0
    %295 = vmatprep.mubr.f32.mxu0 0.0
    %296 = vmatmul.mubr.f32.gmra.mrb[0].mxu0 %v210
    %v297 = vpop.f32.mrb[0].mxu0
    %v298 = vadd.f32 %v230, %v297
    %v299 = vpop.f32.mrb[0].mxu0
    %300 = vdwg.mxu0
    %vm301 = vcmask 130048
    %302 = vst.msk [vmem:[#allocation5] sm:$0xff] %vm301, %v298
    // Predicated region
    $region26: #{forward_impl.1} parent=1 // pred_check
      _
    $region27: #{forward_impl.1} parent=1 // pred_check_branch
      %304 = sbr.rel (0) target = $region29
    $region28: #{forward_impl.1} parent=1 // pred_region
      %s306 = ssub.s32 128, 128
      %307 = vsyncadd [#allocation4], %s306
      %s309 = sshll.u32 [#allocation5], 4
      %s310 = int_to_ptr.vmem [resolvable:$true] %s309
      %312 = dma.vmem_to_hbm [thread:$0]  %s310, 128, %s5, [#allocation4]
    $region29: #{forward_impl.1} parent=1 // pred_fallthru
      _
    // Predicated region
    $region30: #{forward_impl.1} parent=1 // pred_check
      _
    $region31: #{forward_impl.1} parent=1 // pred_check_branch
      %314 = sbr.rel (0) target = $region33
    $region32: #{forward_impl.1} parent=1 // pred_region
      %315 = dma.done [#allocation4], 128
    $region33: #{forward_impl.1} parent=1 // pred_fallthru
      _
    %316 = vsyncpa [#allocation3], 1
    %317 = vsyncpa [#allocation4], 1

</llo_original>
